<compile_context>
chip_gen: v6e
topology: v6e:2x2x1
jax: 0.10.0
libtpu: 0.0.40
codegen_flags: <defaults>
</compile_context>

<pallas_src>
import jax
import jax.numpy as jnp
import numpy as np
from jax.experimental import pallas as pl
from jax.experimental.pallas import tpu as pltpu


def relu_maxpool_kernel(x_ref, sel_ref, o_ref):
    # x_ref:   (bR, 2*W)   row r = [h-even image row (W) | h-odd image row (W)]
    # sel_ref: (W, 2*Wo)   0/1 matrix: [even-lane picker | odd-lane picker]
    # o_ref:   (bR, Wo)
    w = x_ref.shape[-1] // 2
    wo = o_ref.shape[-1]

    x = x_ref[...]
    # H-pool: max of the two contiguous lane halves (VPU, no strided access).
    hmax = jnp.maximum(x[:, :w], x[:, w:])                       # (bR, W)

    # W-pool: one exact 0/1-selection matmul on the idle MXU gives the even and
    # odd W taps side by side; max of the two halves completes the 2x2 window.
    packed = jnp.dot(hmax, sel_ref[...],
                     precision=jax.lax.Precision.HIGHEST,
                     preferred_element_type=jnp.float32)         # (bR, 2*Wo)
    wmax = jnp.maximum(packed[:, :wo], packed[:, wo:])           # (bR, Wo)

    # ReLU folded once after the 4-way max.
    o_ref[...] = jnp.maximum(wmax, 0.0).astype(o_ref.dtype)


def _selection_matrix(w, wo, dtype):
    """(W, 2*Wo) 0/1 matrix: columns [0,Wo) pick even lanes, [Wo,2Wo) pick odd."""
    s = np.zeros((w, 2 * wo), dtype=dtype)
    idx = np.arange(wo)
    s[2 * idx, idx] = 1
    s[2 * idx + 1, wo + idx] = 1
    return jnp.asarray(s)


def _pick_block_rows(total_rows, in_row_bytes, target_bytes=2 * 1024 * 1024):
    """Rows per grid step: whole problem in one step if it fits the ~2 MiB
    input-tile budget, otherwise the largest 8-aligned row count within it.
    (2 MiB in + 0.5 MiB out, double buffered, stays well under every chip's
    default scoped-VMEM limit.)"""
    if total_rows * in_row_bytes <= target_bytes:
        return int(total_rows)
    br = max(8, (target_bytes // max(in_row_bytes, 1)) // 8 * 8)
    return int(min(br, total_rows))


def relu_maxpool_flatten(x):
    """x: (N, C, H, W) float32 (NCHW, like PyTorch). Returns (N, C*(H//2)*(W//2))."""
    n, c, h, w = x.shape
    ho, wo = h // 2, w // 2
    if (h != 2 * ho) or (w != 2 * wo):
        # PyTorch floor-mode max_pool2d drops trailing odd rows/cols.
        x = x[:, :, : 2 * ho, : 2 * wo]
    w_eff = 2 * wo

    rows = n * c * ho                        # one matrix row per output (n, c, ho)
    x2 = x.reshape(rows, 2 * w_eff)          # free contiguous view (no transpose)
    sel = _selection_matrix(w_eff, wo, x.dtype)

    br = _pick_block_rows(rows, 2 * w_eff * x.dtype.itemsize)
    grid = (pl.cdiv(rows, br),)

    out2 = pl.pallas_call(
        relu_maxpool_kernel,
        out_shape=jax.ShapeDtypeStruct((rows, wo), x.dtype),
        grid=grid,
        in_specs=[
            pl.BlockSpec((br, 2 * w_eff), lambda i: (i, 0)),
            pl.BlockSpec((w_eff, 2 * wo), lambda i: (0, 0)),   # constant block: fetched once
        ],
        out_specs=pl.BlockSpec((br, wo), lambda i: (i, 0)),
        compiler_params=pltpu.CompilerParams(
            dimension_semantics=("parallel",)),
    )(x2, sel)

    # Rows are already in (n, c, ho, wo) order -> flatten(start_dim=1) is free.
    return out2.reshape(n, c * ho * wo)


def _reference(x):
    """Pure-JAX reference matching PyTorch semantics exactly."""
    n, c, h, w = x.shape
    ho, wo = h // 2, w // 2
    r = jnp.maximum(x[:, :, : 2 * ho, : 2 * wo], 0.0)
    r = r.reshape(n, c, ho, 2, wo, 2)
    r = jnp.max(r, axis=(3, 5))              # max_pool2d k=2, s=2 (floor mode)
    return r.reshape(n, -1)                  # flatten(start_dim=1)


if __name__ == "__main__":
    key = jax.random.PRNGKey(0)
    x = jax.random.normal(key, (2, 4, 16, 16), dtype=jnp.float32)  # NCHW

    out = jax.block_until_ready(relu_maxpool_flatten(x))

    ref = _reference(x)
    assert out.shape == (2, 4 * 8 * 8), out.shape
    assert np.allclose(np.asarray(out), np.asarray(ref), atol=1e-5, rtol=1e-5), \
        "mismatch vs reference"
    print("KERNEL_OK")
</pallas_src>

<mosaic_0001>
module attributes {stable_mosaic.version = 11 : i64} {
  func.func @relu_maxpool_kernel(%arg0: i32, %arg1: memref<64x32xf32, #tpu.memory_space<vmem>>, %arg2: memref<16x16xf32, #tpu.memory_space<vmem>>, %arg3: memref<64x8xf32, #tpu.memory_space<vmem>>) attributes {dimension_semantics = [#tpu.dimension_semantics<parallel>], iteration_bounds = array<i64: 1>, scalar_prefetch = 0 : i64, scratch_operands = 0 : i64, tpu.core_type = #tpu.core_type<tc>, window_params = [{transform_indices = @transform_0, window_bounds = array<i64: 64, 32>}, {pipeline_mode = #tpu.pipeline_mode<synchronous>, transform_indices = @transform_1, window_bounds = array<i64: 16, 16>}, {transform_indices = @transform_2, window_bounds = array<i64: 64, 8>}]} {
    %c0 = arith.constant 0 : index
    %c0_0 = arith.constant 0 : index
    %0 = vector.load %arg1[%c0, %c0_0] : memref<64x32xf32, #tpu.memory_space<vmem>>, vector<64x32xf32>
    %1 = vector.extract_strided_slice %0 {offsets = [0, 0], sizes = [64, 16], strides = [1, 1]} : vector<64x32xf32> to vector<64x16xf32>
    %2 = vector.extract_strided_slice %0 {offsets = [0, 16], sizes = [64, 16], strides = [1, 1]} : vector<64x32xf32> to vector<64x16xf32>
    %3 = arith.maximumf %1, %2 : vector<64x16xf32>
    %c0_1 = arith.constant 0 : index
    %c0_2 = arith.constant 0 : index
    %4 = vector.load %arg2[%c0_1, %c0_2] : memref<16x16xf32, #tpu.memory_space<vmem>>, vector<16x16xf32>
    %cst = arith.constant dense<0.000000e+00> : vector<64x16xf32>
    %5 = tpu.matmul %3, %4, %cst {dimension_numbers = #tpu.dot_dimension_numbers<[1], [0], [0], [1], [0, 0, 1, 1], [], []>, precision = #tpu.contract_precision<fp32>} : vector<64x16xf32>, vector<16x16xf32>, vector<64x16xf32> -> vector<64x16xf32>
    %6 = vector.extract_strided_slice %5 {offsets = [0, 0], sizes = [64, 8], strides = [1, 1]} : vector<64x16xf32> to vector<64x8xf32>
    %7 = vector.extract_strided_slice %5 {offsets = [0, 8], sizes = [64, 8], strides = [1, 1]} : vector<64x16xf32> to vector<64x8xf32>
    %8 = arith.maximumf %6, %7 : vector<64x8xf32>
    %cst_3 = arith.constant 0.000000e+00 : f32
    %9 = vector.broadcast %cst_3 : f32 to vector<64x8xf32>
    %10 = arith.maximumf %8, %9 : vector<64x8xf32>
    %c0_4 = arith.constant 0 : index
    %c0_5 = arith.constant 0 : index
    %11 = vector.load %arg3[%c0_4, %c0_5] : memref<64x8xf32, #tpu.memory_space<vmem>>, vector<64x8xf32>
    tpu.vector_store %arg3[%c0_4, %c0_5], %10 {strides = array<i32>} : memref<64x8xf32, #tpu.memory_space<vmem>>, vector<64x8xf32>,
    return
  }
  func.func @transform_0(%arg0: i32) -> (i32, i32) {
    %c0_i32 = arith.constant 0 : i32
    %c0_i32_0 = arith.constant 0 : i32
    return %arg0, %c0_i32 : i32, i32
  }
  func.func @transform_1(%arg0: i32) -> (i32, i32) {
    %c0_i32 = arith.constant 0 : i32
    %c0_i32_0 = arith.constant 0 : i32
    %c0_i32_1 = arith.constant 0 : i32
    return %c0_i32, %c0_i32_0 : i32, i32
  }
  func.func @transform_2(%arg0: i32) -> (i32, i32) {
    %c0_i32 = arith.constant 0 : i32
    %c0_i32_0 = arith.constant 0 : i32
    return %arg0, %c0_i32 : i32, i32
  }
}

</mosaic_0001>

<llo_original>
// kernel: tpu_custom_call.1
$region0: #{tpu_custom_call.1}
  #allocation0 [shape = 'u32[]', space=smem, size = 0x4, offset = 0x4, fixed_abs, tag = 'smem constant byte address 0x4 - core index']
  #allocation1 [shape = 'u32[144,128]{1,0:T(1,128)}', space=vmem, size = 0x12000, scoped, tag = 'internal scratch']
  %s0 = inlined_call_operand.vmem [shape: f32[64,32], index: 0, kind: input, shape index: {}]
  %s1 = inlined_call_operand.vmem [shape: f32[16,16], index: 1, kind: input, shape index: {}]
  %s2 = inlined_call_operand.vmem [shape: f32[64,8], index: 2, kind: output, shape index: {}]
  %s3 = sld [smem:[#allocation0]]
  $region18: #{tpu_custom_call.1} parent=0
    _
  %s5 = ssub.s32 1, %s3
  %s6 = scalar_select 0, %s5, %s3
  // Predicated region
  $region2: #{tpu_custom_call.1} parent=0 // pred_check
    _
  $region3: #{tpu_custom_call.1} parent=0 // pred_check_branch
    %8 = sbr.rel (0) target = $region5
  $region4: #{tpu_custom_call.1} parent=0 // pred_region
    _
  $region5: #{tpu_custom_call.1} parent=0 // pred_fallthru
    _
  // Predicated region
  $region6: #{tpu_custom_call.1} parent=0 // pred_check
    _
  $region7: #{tpu_custom_call.1} parent=0 // pred_check_branch
    %10 = sbr.rel (0) target = $region9
  $region8: #{tpu_custom_call.1} parent=0 // pred_region
    _
  $region9: #{tpu_custom_call.1} parent=0 // pred_fallthru
    _
  %v11 = vld [vmem:[%s0] sm:$0xff]
  %v12 = vld [vmem:[%s0 + $0x8] sm:$0xff]
  %v13 = vld [vmem:[%s0 + $0x10] sm:$0xff]
  %v14 = vld [vmem:[%s0 + $0x18] sm:$0xff]
  %v15 = vld [vmem:[%s0 + $0x20] sm:$0xff]
  %v16 = vld [vmem:[%s0 + $0x28] sm:$0xff]
  %v17 = vld [vmem:[%s0 + $0x30] sm:$0xff]
  %v18 = vld [vmem:[%s0 + $0x38] sm:$0xff]
  %27 = vrot.lane.b32.xlu0 %v11, 112
  %v28 = vpop.permute.xlu0 %27
  %29 = vrot.lane.b32.xlu0 %v12, 112
  %v30 = vpop.permute.xlu0 %29
  %31 = vrot.lane.b32.xlu0 %v13, 112
  %v32 = vpop.permute.xlu0 %31
  %33 = vrot.lane.b32.xlu0 %v14, 112
  %v34 = vpop.permute.xlu0 %33
  %35 = vrot.lane.b32.xlu0 %v15, 112
  %v36 = vpop.permute.xlu0 %35
  %37 = vrot.lane.b32.xlu0 %v16, 112
  %v38 = vpop.permute.xlu0 %37
  %39 = vrot.lane.b32.xlu0 %v17, 112
  %v40 = vpop.permute.xlu0 %39
  %41 = vrot.lane.b32.xlu0 %v18, 112
  %v42 = vpop.permute.xlu0 %41
  %v51 = vmax.f32 %v11, %v28
  %v52 = vmax.f32 %v12, %v30
  %v53 = vmax.f32 %v13, %v32
  %v54 = vmax.f32 %v14, %v34
  %v55 = vmax.f32 %v15, %v36
  %v56 = vmax.f32 %v16, %v38
  %v57 = vmax.f32 %v17, %v40
  %v58 = vmax.f32 %v18, %v42
  %v59 = vld [vmem:[%s1] sm:$0xff]
  %v60 = vld [vmem:[%s1 + $0x8] sm:$0xff]
  %vm61 = vcmask 130048
  %v63 = vsel %vm61, %v51, 0
  %v66 = vsel %vm61, %v52, 0
  %v69 = vsel %vm61, %v53, 0
  %v72 = vsel %vm61, %v54, 0
  %v75 = vsel %vm61, %v55, 0
  %v78 = vsel %vm61, %v56, 0
  %v81 = vsel %vm61, %v57, 0
  %v84 = vsel %vm61, %v58, 0
  %86 = vmatprep.subr.mxu0 0.0
  %87 = vmatpush1.msra.mxu0 0.0
  %88 = vmatprep.subr.mxu0 0.0
  %89 = vmatpush1.msra.mxu0 0.0
  %90 = vmatprep.subr.mxu0 0.0
  %91 = vmatpush1.msra.mxu0 0.0
  %92 = vmatprep.subr.mxu0 0.0
  %93 = vmatpush1.msra.mxu0 0.0
  %94 = vmatprep.subr.mxu0 0.0
  %95 = vmatpush1.msra.mxu0 0.0
  %96 = vmatprep.subr.mxu0 0.0
  %97 = vmatpush1.msra.mxu0 0.0
  %98 = vmatprep.subr.mxu0 0.0
  %99 = vmatpush1.msra.mxu0 0.0
  %100 = vmatprep.subr.mxu0 0.0
  %101 = vmatpush1.msra.mxu0 0.0
  %102 = vmatprep.subr.mxu0 0.0
  %103 = vmatpush1.msra.mxu0 0.0
  %104 = vmatprep.subr.mxu0 0.0
  %105 = vmatpush1.msra.mxu0 0.0
  %106 = vmatprep.subr.mxu0 0.0
  %107 = vmatpush1.msra.mxu0 0.0
  %108 = vmatprep.subr.mxu0 0.0
  %109 = vmatpush1.msra.mxu0 0.0
  %110 = vmatprep.subr.mxu0 0.0
  %111 = vmatpush1.msra.mxu0 0.0
  %112 = vmatprep.subr.mxu0 0.0
  %113 = vmatpush1.msra.mxu0 0.0
  %114 = vmatprep.subr.mxu0 0.0
  %v115 = vand.u32 %v60, 4294901760
  %116 = vmatpush1.msra.mxu0 %v115
  %117 = vmatprep.subr.mxu0 0.0
  %v118 = vand.u32 %v59, 4294901760
  %119 = vmatpush1.msra.mxu0 %v118
  %120 = vmatprep.subr.mxu0 0.0
  %121 = vmatpush2.msra.mxu0 0.0
  %122 = vmatprep.subr.mxu0 0.0
  %123 = vmatpush2.msra.mxu0 0.0
  %124 = vmatprep.subr.mxu0 0.0
  %125 = vmatpush2.msra.mxu0 0.0
  %126 = vmatprep.subr.mxu0 0.0
  %127 = vmatpush2.msra.mxu0 0.0
  %128 = vmatprep.subr.mxu0 0.0
  %129 = vmatpush2.msra.mxu0 0.0
  %130 = vmatprep.subr.mxu0 0.0
  %131 = vmatpush2.msra.mxu0 0.0
  %132 = vmatprep.subr.mxu0 0.0
  %133 = vmatpush2.msra.mxu0 0.0
  %134 = vmatprep.subr.mxu0 0.0
  %135 = vmatpush2.msra.mxu0 0.0
  %136 = vmatprep.subr.mxu0 0.0
  %137 = vmatpush2.msra.mxu0 0.0
  %138 = vmatprep.subr.mxu0 0.0
  %139 = vmatpush2.msra.mxu0 0.0
  %140 = vmatprep.subr.mxu0 0.0
  %141 = vmatpush2.msra.mxu0 0.0
  %142 = vmatprep.subr.mxu0 0.0
  %143 = vmatpush2.msra.mxu0 0.0
  %144 = vmatprep.subr.mxu0 0.0
  %145 = vmatpush2.msra.mxu0 0.0
  %146 = vmatprep.subr.mxu0 0.0
  %147 = vmatpush2.msra.mxu0 0.0
  %148 = vmatprep.subr.mxu0 0.0
  %149 = vmatpush2.msra.mxu0 0.0
  %150 = vmatprep.subr.mxu0 0.0
  %151 = vmatpush2.msra.mxu0 0.0
  %152 = vmatprep.mubr.f32.mxu0 0.0
  %v153 = vand.u32 %v63, 4294901760
  %v154 = vsub.f32 %v63, %v153
  %v155 = vand.u32 %v154, 4294901760
  %v156 = vsub.f32 %v154, %v155
  %v157 = vand.u32 %v156, 4294901760
  %158 = vmatmul.mubr.f32.gmra.mxu0 %v157
  %v159 = vpop.f32.mrf.mxu0
  %v160 = vadd.f32 0.0, %v159
  %v161 = vpop.f32.mrf.mxu0
  %162 = vmatprep.mubr.f32.mxu0 0.0
  %v163 = vand.u32 %v66, 4294901760
  %v164 = vsub.f32 %v66, %v163
  %v165 = vand.u32 %v164, 4294901760
  %v166 = vsub.f32 %v164, %v165
  %v167 = vand.u32 %v166, 4294901760
  %168 = vmatmul.mubr.f32.gmra.mxu0 %v167
  %v169 = vpop.f32.mrf.mxu0
  %v170 = vadd.f32 0.0, %v169
  %v171 = vpop.f32.mrf.mxu0
  %172 = vmatprep.mubr.f32.mxu0 0.0
  %v173 = vand.u32 %v69, 4294901760
  %v174 = vsub.f32 %v69, %v173
  %v175 = vand.u32 %v174, 4294901760
  %v176 = vsub.f32 %v174, %v175
  %v177 = vand.u32 %v176, 4294901760
  %178 = vmatmul.mubr.f32.gmra.mxu0 %v177
  %v179 = vpop.f32.mrf.mxu0
  %v180 = vadd.f32 0.0, %v179
  %v181 = vpop.f32.mrf.mxu0
  %182 = vmatprep.mubr.f32.mxu0 0.0
  %v183 = vand.u32 %v72, 4294901760
  %v184 = vsub.f32 %v72, %v183
  %v185 = vand.u32 %v184, 4294901760
  %v186 = vsub.f32 %v184, %v185
  %v187 = vand.u32 %v186, 4294901760
  %188 = vmatmul.mubr.f32.gmra.mxu0 %v187
  %v189 = vpop.f32.mrf.mxu0
  %v190 = vadd.f32 0.0, %v189
  %v191 = vpop.f32.mrf.mxu0
  %192 = vmatprep.mubr.f32.mxu0 0.0
  %v193 = vand.u32 %v75, 4294901760
  %v194 = vsub.f32 %v75, %v193
  %v195 = vand.u32 %v194, 4294901760
  %v196 = vsub.f32 %v194, %v195
  %v197 = vand.u32 %v196, 4294901760
  %198 = vmatmul.mubr.f32.gmra.mxu0 %v197
  %v199 = vpop.f32.mrf.mxu0
  %v200 = vadd.f32 0.0, %v199
  %v201 = vpop.f32.mrf.mxu0
  %202 = vmatprep.mubr.f32.mxu0 0.0
  %v203 = vand.u32 %v78, 4294901760
  %v204 = vsub.f32 %v78, %v203
  %v205 = vand.u32 %v204, 4294901760
  %v206 = vsub.f32 %v204, %v205
  %v207 = vand.u32 %v206, 4294901760
  %208 = vmatmul.mubr.f32.gmra.mxu0 %v207
  %v209 = vpop.f32.mrf.mxu0
  %v210 = vadd.f32 0.0, %v209
  %v211 = vpop.f32.mrf.mxu0
  %212 = vmatprep.mubr.f32.mxu0 0.0
  %v213 = vand.u32 %v81, 4294901760
  %v214 = vsub.f32 %v81, %v213
  %v215 = vand.u32 %v214, 4294901760
  %v216 = vsub.f32 %v214, %v215
  %v217 = vand.u32 %v216, 4294901760
  %218 = vmatmul.mubr.f32.gmra.mxu0 %v217
  %v219 = vpop.f32.mrf.mxu0
  %v220 = vadd.f32 0.0, %v219
  %v221 = vpop.f32.mrf.mxu0
  %222 = vmatprep.mubr.f32.mxu0 0.0
  %v223 = vand.u32 %v84, 4294901760
  %v224 = vsub.f32 %v84, %v223
  %v225 = vand.u32 %v224, 4294901760
  %v226 = vsub.f32 %v224, %v225
  %v227 = vand.u32 %v226, 4294901760
  %228 = vmatmul.mubr.f32.gmra.mxu0 %v227
  %v229 = vpop.f32.mrf.mxu0
  %v230 = vadd.f32 0.0, %v229
  %v231 = vpop.f32.mrf.mxu0
  %232 = vdwg.mxu0
  %233 = vmatprep.subr.mxu0 0.0
  %234 = vmatpush1.msra.mxu0 0.0
  %235 = vmatprep.subr.mxu0 0.0
  %236 = vmatpush1.msra.mxu0 0.0
  %237 = vmatprep.subr.mxu0 0.0
  %238 = vmatpush1.msra.mxu0 0.0
  %239 = vmatprep.subr.mxu0 0.0
  %240 = vmatpush1.msra.mxu0 0.0
  %241 = vmatprep.subr.mxu0 0.0
  %242 = vmatpush1.msra.mxu0 0.0
  %243 = vmatprep.subr.mxu0 0.0
  %244 = vmatpush1.msra.mxu0 0.0
  %245 = vmatprep.subr.mxu0 0.0
  %246 = vmatpush1.msra.mxu0 0.0
  %247 = vmatprep.subr.mxu0 0.0
  %248 = vmatpush1.msra.mxu0 0.0
  %249 = vmatprep.subr.mxu0 0.0
  %250 = vmatpush1.msra.mxu0 0.0
  %251 = vmatprep.subr.mxu0 0.0
  %252 = vmatpush1.msra.mxu0 0.0
  %253 = vmatprep.subr.mxu0 0.0
  %254 = vmatpush1.msra.mxu0 0.0
  %255 = vmatprep.subr.mxu0 0.0
  %256 = vmatpush1.msra.mxu0 0.0
  %257 = vmatprep.subr.mxu0 0.0
  %258 = vmatpush1.msra.mxu0 0.0
  %259 = vmatprep.subr.mxu0 0.0
  %260 = vmatpush1.msra.mxu0 0.0
  %261 = vmatprep.subr.mxu0 0.0
  %v262 = vand.u32 %v60, 4294901760
  %v263 = vsub.f32 %v60, %v262
  %v264 = vand.u32 %v263, 4294901760
  %v265 = vsub.f32 %v263, %v264
  %v266 = vand.u32 %v265, 4294901760
  %267 = vmatpush1.msra.mxu0 %v266
  %268 = vmatprep.subr.mxu0 0.0
  %v269 = vand.u32 %v59, 4294901760
  %v270 = vsub.f32 %v59, %v269
  %v271 = vand.u32 %v270, 4294901760
  %v272 = vsub.f32 %v270, %v271
  %v273 = vand.u32 %v272, 4294901760
  %274 = vmatpush1.msra.mxu0 %v273
  %275 = vmatprep.subr.mxu0 0.0
  %276 = vmatpush2.msra.mxu0 0.0
  %277 = vmatprep.subr.mxu0 0.0
  %278 = vmatpush2.msra.mxu0 0.0
  %279 = vmatprep.subr.mxu0 0.0
  %280 = vmatpush2.msra.mxu0 0.0
  %281 = vmatprep.subr.mxu0 0.0
  %282 = vmatpush2.msra.mxu0 0.0
  %283 = vmatprep.subr.mxu0 0.0
  %284 = vmatpush2.msra.mxu0 0.0
  %285 = vmatprep.subr.mxu0 0.0
  %286 = vmatpush2.msra.mxu0 0.0
  %287 = vmatprep.subr.mxu0 0.0
  %288 = vmatpush2.msra.mxu0 0.0
  %289 = vmatprep.subr.mxu0 0.0
  %290 = vmatpush2.msra.mxu0 0.0
  %291 = vmatprep.subr.mxu0 0.0
  %292 = vmatpush2.msra.mxu0 0.0
  %293 = vmatprep.subr.mxu0 0.0
  %294 = vmatpush2.msra.mxu0 0.0
  %295 = vmatprep.subr.mxu0 0.0
  %296 = vmatpush2.msra.mxu0 0.0
  %297 = vmatprep.subr.mxu0 0.0
  %298 = vmatpush2.msra.mxu0 0.0
  %299 = vmatprep.subr.mxu0 0.0
  %300 = vmatpush2.msra.mxu0 0.0
  %301 = vmatprep.subr.mxu0 0.0
  %302 = vmatpush2.msra.mxu0 0.0
  %303 = vmatprep.subr.mxu0 0.0
  %304 = vmatpush2.msra.mxu0 0.0
  %305 = vmatprep.subr.mxu0 0.0
  %306 = vmatpush2.msra.mxu0 0.0
  %307 = vmatprep.mubr.f32.mxu0 0.0
  %v308 = vand.u32 %v63, 4294901760
  %309 = vmatmul.mubr.f32.gmra.mxu0 %v308
  %v310 = vpop.f32.mrf.mxu0
  %v311 = vadd.f32 %v160, %v310
  %v312 = vpop.f32.mrf.mxu0
  %313 = vmatprep.mubr.f32.mxu0 0.0
  %v314 = vand.u32 %v66, 4294901760
  %315 = vmatmul.mubr.f32.gmra.mxu0 %v314
  %v316 = vpop.f32.mrf.mxu0
  %v317 = vadd.f32 %v170, %v316
  %v318 = vpop.f32.mrf.mxu0
  %319 = vmatprep.mubr.f32.mxu0 0.0
  %v320 = vand.u32 %v69, 4294901760
  %321 = vmatmul.mubr.f32.gmra.mxu0 %v320
  %v322 = vpop.f32.mrf.mxu0
  %v323 = vadd.f32 %v180, %v322
  %v324 = vpop.f32.mrf.mxu0
  %325 = vmatprep.mubr.f32.mxu0 0.0
  %v326 = vand.u32 %v72, 4294901760
  %327 = vmatmul.mubr.f32.gmra.mxu0 %v326
  %v328 = vpop.f32.mrf.mxu0
  %v329 = vadd.f32 %v190, %v328
  %v330 = vpop.f32.mrf.mxu0
  %331 = vmatprep.mubr.f32.mxu0 0.0
  %v332 = vand.u32 %v75, 4294901760
  %333 = vmatmul.mubr.f32.gmra.mxu0 %v332
  %v334 = vpop.f32.mrf.mxu0
  %v335 = vadd.f32 %v200, %v334
  %v336 = vpop.f32.mrf.mxu0
  %337 = vmatprep.mubr.f32.mxu0 0.0
  %v338 = vand.u32 %v78, 4294901760
  %339 = vmatmul.mubr.f32.gmra.mxu0 %v338
  %v340 = vpop.f32.mrf.mxu0
  %v341 = vadd.f32 %v210, %v340
  %v342 = vpop.f32.mrf.mxu0
  %343 = vmatprep.mubr.f32.mxu0 0.0
  %v344 = vand.u32 %v81, 4294901760
  %345 = vmatmul.mubr.f32.gmra.mxu0 %v344
  %v346 = vpop.f32.mrf.mxu0
  %v347 = vadd.f32 %v220, %v346
  %v348 = vpop.f32.mrf.mxu0
  %349 = vmatprep.mubr.f32.mxu0 0.0
  %v350 = vand.u32 %v84, 4294901760
  %351 = vmatmul.mubr.f32.gmra.mxu0 %v350
  %v352 = vpop.f32.mrf.mxu0
  %v353 = vadd.f32 %v230, %v352
  %v354 = vpop.f32.mrf.mxu0
  %355 = vdwg.mxu0
  %356 = vmatprep.subr.mxu0 0.0
  %357 = vmatpush1.msra.mxu0 0.0
  %358 = vmatprep.subr.mxu0 0.0
  %359 = vmatpush1.msra.mxu0 0.0
  %360 = vmatprep.subr.mxu0 0.0
  %361 = vmatpush1.msra.mxu0 0.0
  %362 = vmatprep.subr.mxu0 0.0
  %363 = vmatpush1.msra.mxu0 0.0
  %364 = vmatprep.subr.mxu0 0.0
  %365 = vmatpush1.msra.mxu0 0.0
  %366 = vmatprep.subr.mxu0 0.0
  %367 = vmatpush1.msra.mxu0 0.0
  %368 = vmatprep.subr.mxu0 0.0
  %369 = vmatpush1.msra.mxu0 0.0
  %370 = vmatprep.subr.mxu0 0.0
  %371 = vmatpush1.msra.mxu0 0.0
  %372 = vmatprep.subr.mxu0 0.0
  %373 = vmatpush1.msra.mxu0 0.0
  %374 = vmatprep.subr.mxu0 0.0
  %375 = vmatpush1.msra.mxu0 0.0
  %376 = vmatprep.subr.mxu0 0.0
  %377 = vmatpush1.msra.mxu0 0.0
  %378 = vmatprep.subr.mxu0 0.0
  %379 = vmatpush1.msra.mxu0 0.0
  %380 = vmatprep.subr.mxu0 0.0
  %381 = vmatpush1.msra.mxu0 0.0
  %382 = vmatprep.subr.mxu0 0.0
  %383 = vmatpush1.msra.mxu0 0.0
  %384 = vmatprep.subr.mxu0 0.0
  %v385 = vand.u32 %v60, 4294901760
  %v386 = vsub.f32 %v60, %v385
  %387 = vmatpush1.msra.mxu0 %v386
  %388 = vmatprep.subr.mxu0 0.0
  %v389 = vand.u32 %v59, 4294901760
  %v390 = vsub.f32 %v59, %v389
  %391 = vmatpush1.msra.mxu0 %v390
  %392 = vmatprep.subr.mxu0 0.0
  %393 = vmatpush2.msra.mxu0 0.0
  %394 = vmatprep.subr.mxu0 0.0
  %395 = vmatpush2.msra.mxu0 0.0
  %396 = vmatprep.subr.mxu0 0.0
  %397 = vmatpush2.msra.mxu0 0.0
  %398 = vmatprep.subr.mxu0 0.0
  %399 = vmatpush2.msra.mxu0 0.0
  %400 = vmatprep.subr.mxu0 0.0
  %401 = vmatpush2.msra.mxu0 0.0
  %402 = vmatprep.subr.mxu0 0.0
  %403 = vmatpush2.msra.mxu0 0.0
  %404 = vmatprep.subr.mxu0 0.0
  %405 = vmatpush2.msra.mxu0 0.0
  %406 = vmatprep.subr.mxu0 0.0
  %407 = vmatpush2.msra.mxu0 0.0
  %408 = vmatprep.subr.mxu0 0.0
  %409 = vmatpush2.msra.mxu0 0.0
  %410 = vmatprep.subr.mxu0 0.0
  %411 = vmatpush2.msra.mxu0 0.0
  %412 = vmatprep.subr.mxu0 0.0
  %413 = vmatpush2.msra.mxu0 0.0
  %414 = vmatprep.subr.mxu0 0.0
  %415 = vmatpush2.msra.mxu0 0.0
  %416 = vmatprep.subr.mxu0 0.0
  %417 = vmatpush2.msra.mxu0 0.0
  %418 = vmatprep.subr.mxu0 0.0
  %419 = vmatpush2.msra.mxu0 0.0
  %420 = vmatprep.subr.mxu0 0.0
  %421 = vmatpush2.msra.mxu0 0.0
  %422 = vmatprep.subr.mxu0 0.0
  %423 = vmatpush2.msra.mxu0 0.0
  %424 = vmatprep.mubr.f32.mxu0 0.0
  %v425 = vand.u32 %v63, 4294901760
  %v426 = vsub.f32 %v63, %v425
  %427 = vmatmul.mubr.f32.gmra.mxu0 %v426
  %v428 = vpop.f32.mrf.mxu0
  %v429 = vadd.f32 %v311, %v428
  %v430 = vpop.f32.mrf.mxu0
  %431 = vmatprep.mubr.f32.mxu0 0.0
  %v432 = vand.u32 %v66, 4294901760
  %v433 = vsub.f32 %v66, %v432
  %434 = vmatmul.mubr.f32.gmra.mxu0 %v433
  %v435 = vpop.f32.mrf.mxu0
  %v436 = vadd.f32 %v317, %v435
  %v437 = vpop.f32.mrf.mxu0
  %438 = vmatprep.mubr.f32.mxu0 0.0
  %v439 = vand.u32 %v69, 4294901760
  %v440 = vsub.f32 %v69, %v439
  %441 = vmatmul.mubr.f32.gmra.mxu0 %v440
  %v442 = vpop.f32.mrf.mxu0
  %v443 = vadd.f32 %v323, %v442
  %v444 = vpop.f32.mrf.mxu0
  %445 = vmatprep.mubr.f32.mxu0 0.0
  %v446 = vand.u32 %v72, 4294901760
  %v447 = vsub.f32 %v72, %v446
  %448 = vmatmul.mubr.f32.gmra.mxu0 %v447
  %v449 = vpop.f32.mrf.mxu0
  %v450 = vadd.f32 %v329, %v449
  %v451 = vpop.f32.mrf.mxu0
  %452 = vmatprep.mubr.f32.mxu0 0.0
  %v453 = vand.u32 %v75, 4294901760
  %v454 = vsub.f32 %v75, %v453
  %455 = vmatmul.mubr.f32.gmra.mxu0 %v454
  %v456 = vpop.f32.mrf.mxu0
  %v457 = vadd.f32 %v335, %v456
  %v458 = vpop.f32.mrf.mxu0
  %459 = vmatprep.mubr.f32.mxu0 0.0
  %v460 = vand.u32 %v78, 4294901760
  %v461 = vsub.f32 %v78, %v460
  %462 = vmatmul.mubr.f32.gmra.mxu0 %v461
  %v463 = vpop.f32.mrf.mxu0
  %v464 = vadd.f32 %v341, %v463
  %v465 = vpop.f32.mrf.mxu0
  %466 = vmatprep.mubr.f32.mxu0 0.0
  %v467 = vand.u32 %v81, 4294901760
  %v468 = vsub.f32 %v81, %v467
  %469 = vmatmul.mubr.f32.gmra.mxu0 %v468
  %v470 = vpop.f32.mrf.mxu0
  %v471 = vadd.f32 %v347, %v470
  %v472 = vpop.f32.mrf.mxu0
  %473 = vmatprep.mubr.f32.mxu0 0.0
  %v474 = vand.u32 %v84, 4294901760
  %v475 = vsub.f32 %v84, %v474
  %476 = vmatmul.mubr.f32.gmra.mxu0 %v475
  %v477 = vpop.f32.mrf.mxu0
  %v478 = vadd.f32 %v353, %v477
  %v479 = vpop.f32.mrf.mxu0
  %480 = vdwg.mxu0
  %481 = vmatprep.subr.mxu0 0.0
  %482 = vmatpush1.msra.mxu0 0.0
  %483 = vmatprep.subr.mxu0 0.0
  %484 = vmatpush1.msra.mxu0 0.0
  %485 = vmatprep.subr.mxu0 0.0
  %486 = vmatpush1.msra.mxu0 0.0
  %487 = vmatprep.subr.mxu0 0.0
  %488 = vmatpush1.msra.mxu0 0.0
  %489 = vmatprep.subr.mxu0 0.0
  %490 = vmatpush1.msra.mxu0 0.0
  %491 = vmatprep.subr.mxu0 0.0
  %492 = vmatpush1.msra.mxu0 0.0
  %493 = vmatprep.subr.mxu0 0.0
  %494 = vmatpush1.msra.mxu0 0.0
  %495 = vmatprep.subr.mxu0 0.0
  %496 = vmatpush1.msra.mxu0 0.0
  %497 = vmatprep.subr.mxu0 0.0
  %498 = vmatpush1.msra.mxu0 0.0
  %499 = vmatprep.subr.mxu0 0.0
  %500 = vmatpush1.msra.mxu0 0.0
  %501 = vmatprep.subr.mxu0 0.0
  %502 = vmatpush1.msra.mxu0 0.0
  %503 = vmatprep.subr.mxu0 0.0
  %504 = vmatpush1.msra.mxu0 0.0
  %505 = vmatprep.subr.mxu0 0.0
  %506 = vmatpush1.msra.mxu0 0.0
  %507 = vmatprep.subr.mxu0 0.0
  %508 = vmatpush1.msra.mxu0 0.0
  %509 = vmatprep.subr.mxu0 0.0
  %v510 = vand.u32 %v60, 4294901760
  %511 = vmatpush1.msra.mxu0 %v510
  %512 = vmatprep.subr.mxu0 0.0
  %v513 = vand.u32 %v59, 4294901760
  %514 = vmatpush1.msra.mxu0 %v513
  %515 = vmatprep.subr.mxu0 0.0
  %516 = vmatpush2.msra.mxu0 0.0
  %517 = vmatprep.subr.mxu0 0.0
  %518 = vmatpush2.msra.mxu0 0.0
  %519 = vmatprep.subr.mxu0 0.0
  %520 = vmatpush2.msra.mxu0 0.0
  %521 = vmatprep.subr.mxu0 0.0
  %522 = vmatpush2.msra.mxu0 0.0
  %523 = vmatprep.subr.mxu0 0.0
  %524 = vmatpush2.msra.mxu0 0.0
  %525 = vmatprep.subr.mxu0 0.0
  %526 = vmatpush2.msra.mxu0 0.0
  %527 = vmatprep.subr.mxu0 0.0
  %528 = vmatpush2.msra.mxu0 0.0
  %529 = vmatprep.subr.mxu0 0.0
  %530 = vmatpush2.msra.mxu0 0.0
  %531 = vmatprep.subr.mxu0 0.0
  %532 = vmatpush2.msra.mxu0 0.0
  %533 = vmatprep.subr.mxu0 0.0
  %534 = vmatpush2.msra.mxu0 0.0
  %535 = vmatprep.subr.mxu0 0.0
  %536 = vmatpush2.msra.mxu0 0.0
  %537 = vmatprep.subr.mxu0 0.0
  %538 = vmatpush2.msra.mxu0 0.0
  %539 = vmatprep.subr.mxu0 0.0
  %540 = vmatpush2.msra.mxu0 0.0
  %541 = vmatprep.subr.mxu0 0.0
  %542 = vmatpush2.msra.mxu0 0.0
  %543 = vmatprep.subr.mxu0 0.0
  %544 = vmatpush2.msra.mxu0 0.0
  %545 = vmatprep.subr.mxu0 0.0
  %546 = vmatpush2.msra.mxu0 0.0
  %547 = vmatprep.mubr.f32.mxu0 0.0
  %v548 = vand.u32 %v63, 4294901760
  %v549 = vsub.f32 %v63, %v548
  %v550 = vand.u32 %v549, 4294901760
  %551 = vmatmul.mubr.f32.gmra.mxu0 %v550
  %v552 = vpop.f32.mrf.mxu0
  %v553 = vadd.f32 %v429, %v552
  %v554 = vpop.f32.mrf.mxu0
  %555 = vmatprep.mubr.f32.mxu0 0.0
  %v556 = vand.u32 %v66, 4294901760
  %v557 = vsub.f32 %v66, %v556
  %v558 = vand.u32 %v557, 4294901760
  %559 = vmatmul.mubr.f32.gmra.mxu0 %v558
  %v560 = vpop.f32.mrf.mxu0
  %v561 = vadd.f32 %v436, %v560
  %v562 = vpop.f32.mrf.mxu0
  %563 = vmatprep.mubr.f32.mxu0 0.0
  %v564 = vand.u32 %v69, 4294901760
  %v565 = vsub.f32 %v69, %v564
  %v566 = vand.u32 %v565, 4294901760
  %567 = vmatmul.mubr.f32.gmra.mxu0 %v566
  %v568 = vpop.f32.mrf.mxu0
  %v569 = vadd.f32 %v443, %v568
  %v570 = vpop.f32.mrf.mxu0
  %571 = vmatprep.mubr.f32.mxu0 0.0
  %v572 = vand.u32 %v72, 4294901760
  %v573 = vsub.f32 %v72, %v572
  %v574 = vand.u32 %v573, 4294901760
  %575 = vmatmul.mubr.f32.gmra.mxu0 %v574
  %v576 = vpop.f32.mrf.mxu0
  %v577 = vadd.f32 %v450, %v576
  %v578 = vpop.f32.mrf.mxu0
  %579 = vmatprep.mubr.f32.mxu0 0.0
  %v580 = vand.u32 %v75, 4294901760
  %v581 = vsub.f32 %v75, %v580
  %v582 = vand.u32 %v581, 4294901760
  %583 = vmatmul.mubr.f32.gmra.mxu0 %v582
  %v584 = vpop.f32.mrf.mxu0
  %v585 = vadd.f32 %v457, %v584
  %v586 = vpop.f32.mrf.mxu0
  %587 = vmatprep.mubr.f32.mxu0 0.0
  %v588 = vand.u32 %v78, 4294901760
  %v589 = vsub.f32 %v78, %v588
  %v590 = vand.u32 %v589, 4294901760
  %591 = vmatmul.mubr.f32.gmra.mxu0 %v590
  %v592 = vpop.f32.mrf.mxu0
  %v593 = vadd.f32 %v464, %v592
  %v594 = vpop.f32.mrf.mxu0
  %595 = vmatprep.mubr.f32.mxu0 0.0
  %v596 = vand.u32 %v81, 4294901760
  %v597 = vsub.f32 %v81, %v596
  %v598 = vand.u32 %v597, 4294901760
  %599 = vmatmul.mubr.f32.gmra.mxu0 %v598
  %v600 = vpop.f32.mrf.mxu0
  %v601 = vadd.f32 %v471, %v600
  %v602 = vpop.f32.mrf.mxu0
  %603 = vmatprep.mubr.f32.mxu0 0.0
  %v604 = vand.u32 %v84, 4294901760
  %v605 = vsub.f32 %v84, %v604
  %v606 = vand.u32 %v605, 4294901760
  %607 = vmatmul.mubr.f32.gmra.mxu0 %v606
  %v608 = vpop.f32.mrf.mxu0
  %v609 = vadd.f32 %v478, %v608
  %v610 = vpop.f32.mrf.mxu0
  %611 = vdwg.mxu0
  %612 = vmatprep.subr.mxu0 0.0
  %613 = vmatpush1.msra.mxu0 0.0
  %614 = vmatprep.subr.mxu0 0.0
  %615 = vmatpush1.msra.mxu0 0.0
  %616 = vmatprep.subr.mxu0 0.0
  %617 = vmatpush1.msra.mxu0 0.0
  %618 = vmatprep.subr.mxu0 0.0
  %619 = vmatpush1.msra.mxu0 0.0
  %620 = vmatprep.subr.mxu0 0.0
  %621 = vmatpush1.msra.mxu0 0.0
  %622 = vmatprep.subr.mxu0 0.0
  %623 = vmatpush1.msra.mxu0 0.0
  %624 = vmatprep.subr.mxu0 0.0
  %625 = vmatpush1.msra.mxu0 0.0
  %626 = vmatprep.subr.mxu0 0.0
  %627 = vmatpush1.msra.mxu0 0.0
  %628 = vmatprep.subr.mxu0 0.0
  %629 = vmatpush1.msra.mxu0 0.0
  %630 = vmatprep.subr.mxu0 0.0
  %631 = vmatpush1.msra.mxu0 0.0
  %632 = vmatprep.subr.mxu0 0.0
  %633 = vmatpush1.msra.mxu0 0.0
  %634 = vmatprep.subr.mxu0 0.0
  %635 = vmatpush1.msra.mxu0 0.0
  %636 = vmatprep.subr.mxu0 0.0
  %637 = vmatpush1.msra.mxu0 0.0
  %638 = vmatprep.subr.mxu0 0.0
  %639 = vmatpush1.msra.mxu0 0.0
  %640 = vmatprep.subr.mxu0 0.0
  %v641 = vand.u32 %v60, 4294901760
  %v642 = vsub.f32 %v60, %v641
  %v643 = vand.u32 %v642, 4294901760
  %644 = vmatpush1.msra.mxu0 %v643
  %645 = vmatprep.subr.mxu0 0.0
  %v646 = vand.u32 %v59, 4294901760
  %v647 = vsub.f32 %v59, %v646
  %v648 = vand.u32 %v647, 4294901760
  %649 = vmatpush1.msra.mxu0 %v648
  %650 = vmatprep.subr.mxu0 0.0
  %651 = vmatpush2.msra.mxu0 0.0
  %652 = vmatprep.subr.mxu0 0.0
  %653 = vmatpush2.msra.mxu0 0.0
  %654 = vmatprep.subr.mxu0 0.0
  %655 = vmatpush2.msra.mxu0 0.0
  %656 = vmatprep.subr.mxu0 0.0
  %657 = vmatpush2.msra.mxu0 0.0
  %658 = vmatprep.subr.mxu0 0.0
  %659 = vmatpush2.msra.mxu0 0.0
  %660 = vmatprep.subr.mxu0 0.0
  %661 = vmatpush2.msra.mxu0 0.0
  %662 = vmatprep.subr.mxu0 0.0
  %663 = vmatpush2.msra.mxu0 0.0
  %664 = vmatprep.subr.mxu0 0.0
  %665 = vmatpush2.msra.mxu0 0.0
  %666 = vmatprep.subr.mxu0 0.0
  %667 = vmatpush2.msra.mxu0 0.0
  %668 = vmatprep.subr.mxu0 0.0
  %669 = vmatpush2.msra.mxu0 0.0
  %670 = vmatprep.subr.mxu0 0.0
  %671 = vmatpush2.msra.mxu0 0.0
  %672 = vmatprep.subr.mxu0 0.0
  %673 = vmatpush2.msra.mxu0 0.0
  %674 = vmatprep.subr.mxu0 0.0
  %675 = vmatpush2.msra.mxu0 0.0
  %676 = vmatprep.subr.mxu0 0.0
  %677 = vmatpush2.msra.mxu0 0.0
  %678 = vmatprep.subr.mxu0 0.0
  %679 = vmatpush2.msra.mxu0 0.0
  %680 = vmatprep.subr.mxu0 0.0
  %681 = vmatpush2.msra.mxu0 0.0
  %682 = vmatprep.mubr.f32.mxu0 0.0
  %v683 = vand.u32 %v63, 4294901760
  %684 = vmatmul.mubr.f32.gmra.mxu0 %v683
  %v685 = vpop.f32.mrf.mxu0
  %v686 = vadd.f32 %v553, %v685
  %v687 = vpop.f32.mrf.mxu0
  %688 = vmatprep.mubr.f32.mxu0 0.0
  %v689 = vand.u32 %v66, 4294901760
  %690 = vmatmul.mubr.f32.gmra.mxu0 %v689
  %v691 = vpop.f32.mrf.mxu0
  %v692 = vadd.f32 %v561, %v691
  %v693 = vpop.f32.mrf.mxu0
  %694 = vmatprep.mubr.f32.mxu0 0.0
  %v695 = vand.u32 %v69, 4294901760
  %696 = vmatmul.mubr.f32.gmra.mxu0 %v695
  %v697 = vpop.f32.mrf.mxu0
  %v698 = vadd.f32 %v569, %v697
  %v699 = vpop.f32.mrf.mxu0
  %700 = vmatprep.mubr.f32.mxu0 0.0
  %v701 = vand.u32 %v72, 4294901760
  %702 = vmatmul.mubr.f32.gmra.mxu0 %v701
  %v703 = vpop.f32.mrf.mxu0
  %v704 = vadd.f32 %v577, %v703
  %v705 = vpop.f32.mrf.mxu0
  %706 = vmatprep.mubr.f32.mxu0 0.0
  %v707 = vand.u32 %v75, 4294901760
  %708 = vmatmul.mubr.f32.gmra.mxu0 %v707
  %v709 = vpop.f32.mrf.mxu0
  %v710 = vadd.f32 %v585, %v709
  %v711 = vpop.f32.mrf.mxu0
  %712 = vmatprep.mubr.f32.mxu0 0.0
  %v713 = vand.u32 %v78, 4294901760
  %714 = vmatmul.mubr.f32.gmra.mxu0 %v713
  %v715 = vpop.f32.mrf.mxu0
  %v716 = vadd.f32 %v593, %v715
  %v717 = vpop.f32.mrf.mxu0
  %718 = vmatprep.mubr.f32.mxu0 0.0
  %v719 = vand.u32 %v81, 4294901760
  %720 = vmatmul.mubr.f32.gmra.mxu0 %v719
  %v721 = vpop.f32.mrf.mxu0
  %v722 = vadd.f32 %v601, %v721
  %v723 = vpop.f32.mrf.mxu0
  %724 = vmatprep.mubr.f32.mxu0 0.0
  %v725 = vand.u32 %v84, 4294901760
  %726 = vmatmul.mubr.f32.gmra.mxu0 %v725
  %v727 = vpop.f32.mrf.mxu0
  %v728 = vadd.f32 %v609, %v727
  %v729 = vpop.f32.mrf.mxu0
  %730 = vdwg.mxu0
  %731 = vmatprep.subr.mxu0 0.0
  %732 = vmatpush1.msra.mxu0 0.0
  %733 = vmatprep.subr.mxu0 0.0
  %734 = vmatpush1.msra.mxu0 0.0
  %735 = vmatprep.subr.mxu0 0.0
  %736 = vmatpush1.msra.mxu0 0.0
  %737 = vmatprep.subr.mxu0 0.0
  %738 = vmatpush1.msra.mxu0 0.0
  %739 = vmatprep.subr.mxu0 0.0
  %740 = vmatpush1.msra.mxu0 0.0
  %741 = vmatprep.subr.mxu0 0.0
  %742 = vmatpush1.msra.mxu0 0.0
  %743 = vmatprep.subr.mxu0 0.0
  %744 = vmatpush1.msra.mxu0 0.0
  %745 = vmatprep.subr.mxu0 0.0
  %746 = vmatpush1.msra.mxu0 0.0
  %747 = vmatprep.subr.mxu0 0.0
  %748 = vmatpush1.msra.mxu0 0.0
  %749 = vmatprep.subr.mxu0 0.0
  %750 = vmatpush1.msra.mxu0 0.0
  %751 = vmatprep.subr.mxu0 0.0
  %752 = vmatpush1.msra.mxu0 0.0
  %753 = vmatprep.subr.mxu0 0.0
  %754 = vmatpush1.msra.mxu0 0.0
  %755 = vmatprep.subr.mxu0 0.0
  %756 = vmatpush1.msra.mxu0 0.0
  %757 = vmatprep.subr.mxu0 0.0
  %758 = vmatpush1.msra.mxu0 0.0
  %759 = vmatprep.subr.mxu0 0.0
  %v760 = vand.u32 %v60, 4294901760
  %761 = vmatpush1.msra.mxu0 %v760
  %762 = vmatprep.subr.mxu0 0.0
  %v763 = vand.u32 %v59, 4294901760
  %764 = vmatpush1.msra.mxu0 %v763
  %765 = vmatprep.subr.mxu0 0.0
  %766 = vmatpush2.msra.mxu0 0.0
  %767 = vmatprep.subr.mxu0 0.0
  %768 = vmatpush2.msra.mxu0 0.0
  %769 = vmatprep.subr.mxu0 0.0
  %770 = vmatpush2.msra.mxu0 0.0
  %771 = vmatprep.subr.mxu0 0.0
  %772 = vmatpush2.msra.mxu0 0.0
  %773 = vmatprep.subr.mxu0 0.0
  %774 = vmatpush2.msra.mxu0 0.0
  %775 = vmatprep.subr.mxu0 0.0
  %776 = vmatpush2.msra.mxu0 0.0
  %777 = vmatprep.subr.mxu0 0.0
  %778 = vmatpush2.msra.mxu0 0.0
  %779 = vmatprep.subr.mxu0 0.0
  %780 = vmatpush2.msra.mxu0 0.0
  %781 = vmatprep.subr.mxu0 0.0
  %782 = vmatpush2.msra.mxu0 0.0
  %783 = vmatprep.subr.mxu0 0.0
  %784 = vmatpush2.msra.mxu0 0.0
  %785 = vmatprep.subr.mxu0 0.0
  %786 = vmatpush2.msra.mxu0 0.0
  %787 = vmatprep.subr.mxu0 0.0
  %788 = vmatpush2.msra.mxu0 0.0
  %789 = vmatprep.subr.mxu0 0.0
  %790 = vmatpush2.msra.mxu0 0.0
  %791 = vmatprep.subr.mxu0 0.0
  %792 = vmatpush2.msra.mxu0 0.0
  %793 = vmatprep.subr.mxu0 0.0
  %794 = vmatpush2.msra.mxu0 0.0
  %795 = vmatprep.subr.mxu0 0.0
  %796 = vmatpush2.msra.mxu0 0.0
  %797 = vmatprep.mubr.f32.mxu0 0.0
  %v798 = vand.u32 %v63, 4294901760
  %799 = vmatmul.mubr.f32.gmra.mxu0 %v798
  %v800 = vpop.f32.mrf.mxu0
  %v801 = vadd.f32 %v686, %v800
  %v802 = vpop.f32.mrf.mxu0
  %803 = vmatprep.mubr.f32.mxu0 0.0
  %v804 = vand.u32 %v66, 4294901760
  %805 = vmatmul.mubr.f32.gmra.mxu0 %v804
  %v806 = vpop.f32.mrf.mxu0
  %v807 = vadd.f32 %v692, %v806
  %v808 = vpop.f32.mrf.mxu0
  %809 = vmatprep.mubr.f32.mxu0 0.0
  %v810 = vand.u32 %v69, 4294901760
  %811 = vmatmul.mubr.f32.gmra.mxu0 %v810
  %v812 = vpop.f32.mrf.mxu0
  %v813 = vadd.f32 %v698, %v812
  %v814 = vpop.f32.mrf.mxu0
  %815 = vmatprep.mubr.f32.mxu0 0.0
  %v816 = vand.u32 %v72, 4294901760
  %817 = vmatmul.mubr.f32.gmra.mxu0 %v816
  %v818 = vpop.f32.mrf.mxu0
  %v819 = vadd.f32 %v704, %v818
  %v820 = vpop.f32.mrf.mxu0
  %821 = vmatprep.mubr.f32.mxu0 0.0
  %v822 = vand.u32 %v75, 4294901760
  %823 = vmatmul.mubr.f32.gmra.mxu0 %v822
  %v824 = vpop.f32.mrf.mxu0
  %v825 = vadd.f32 %v710, %v824
  %v826 = vpop.f32.mrf.mxu0
  %827 = vmatprep.mubr.f32.mxu0 0.0
  %v828 = vand.u32 %v78, 4294901760
  %829 = vmatmul.mubr.f32.gmra.mxu0 %v828
  %v830 = vpop.f32.mrf.mxu0
  %v831 = vadd.f32 %v716, %v830
  %v832 = vpop.f32.mrf.mxu0
  %833 = vmatprep.mubr.f32.mxu0 0.0
  %v834 = vand.u32 %v81, 4294901760
  %835 = vmatmul.mubr.f32.gmra.mxu0 %v834
  %v836 = vpop.f32.mrf.mxu0
  %v837 = vadd.f32 %v722, %v836
  %v838 = vpop.f32.mrf.mxu0
  %839 = vmatprep.mubr.f32.mxu0 0.0
  %v840 = vand.u32 %v84, 4294901760
  %841 = vmatmul.mubr.f32.gmra.mxu0 %v840
  %v842 = vpop.f32.mrf.mxu0
  %v843 = vadd.f32 %v728, %v842
  %v844 = vpop.f32.mrf.mxu0
  %845 = vdwg.mxu0
  %854 = vrot.lane.b32.xlu0 %v801, 120
  %v855 = vpop.permute.xlu0 %854
  %856 = vrot.lane.b32.xlu0 %v807, 120
  %v857 = vpop.permute.xlu0 %856
  %858 = vrot.lane.b32.xlu0 %v813, 120
  %v859 = vpop.permute.xlu0 %858
  %860 = vrot.lane.b32.xlu0 %v819, 120
  %v861 = vpop.permute.xlu0 %860
  %862 = vrot.lane.b32.xlu0 %v825, 120
  %v863 = vpop.permute.xlu0 %862
  %864 = vrot.lane.b32.xlu0 %v831, 120
  %v865 = vpop.permute.xlu0 %864
  %866 = vrot.lane.b32.xlu0 %v837, 120
  %v867 = vpop.permute.xlu0 %866
  %868 = vrot.lane.b32.xlu0 %v843, 120
  %v869 = vpop.permute.xlu0 %868
  %v878 = vmax.f32 %v801, %v855
  %v879 = vmax.f32 %v807, %v857
  %v880 = vmax.f32 %v813, %v859
  %v881 = vmax.f32 %v819, %v861
  %v882 = vmax.f32 %v825, %v863
  %v883 = vmax.f32 %v831, %v865
  %v884 = vmax.f32 %v837, %v867
  %v885 = vmax.f32 %v843, %v869
  %v886 = vmax.f32 %v878, 0.0
  %v887 = vmax.f32 %v879, 0.0
  %v888 = vmax.f32 %v880, 0.0
  %v889 = vmax.f32 %v881, 0.0
  %v890 = vmax.f32 %v882, 0.0
  %v891 = vmax.f32 %v883, 0.0
  %v892 = vmax.f32 %v884, 0.0
  %v893 = vmax.f32 %v885, 0.0
  %vm894 = vcmask 64512
  %895 = vst.msk [vmem:[%s2] sm:$0xff] %vm894, %v886
  %896 = vst.msk [vmem:[%s2 + $0x8] sm:$0xff] %vm894, %v887
  %897 = vst.msk [vmem:[%s2 + $0x10] sm:$0xff] %vm894, %v888
  %898 = vst.msk [vmem:[%s2 + $0x18] sm:$0xff] %vm894, %v889
  %899 = vst.msk [vmem:[%s2 + $0x20] sm:$0xff] %vm894, %v890
  %900 = vst.msk [vmem:[%s2 + $0x28] sm:$0xff] %vm894, %v891
  %901 = vst.msk [vmem:[%s2 + $0x30] sm:$0xff] %vm894, %v892
  %902 = vst.msk [vmem:[%s2 + $0x38] sm:$0xff] %vm894, %v893
  // Predicated region
  $region10: #{tpu_custom_call.1} parent=0 // pred_check
    _
  $region11: #{tpu_custom_call.1} parent=0 // pred_check_branch
    %904 = sbr.rel (0) target = $region13
  $region12: #{tpu_custom_call.1} parent=0 // pred_region
    _
  $region13: #{tpu_custom_call.1} parent=0 // pred_fallthru
    _
  // Predicated region
  $region14: #{tpu_custom_call.1} parent=0 // pred_check
    _
  $region15: #{tpu_custom_call.1} parent=0 // pred_check_branch
    %906 = sbr.rel (0) target = $region17
  $region16: #{tpu_custom_call.1} parent=0 // pred_region
    _
  $region17: #{tpu_custom_call.1} parent=0 // pred_fallthru
    _

</llo_original>
